<compile_context>
chip_gen: v5e
topology: v5e:2x2
jax: 0.10.0
libtpu: 0.0.40
codegen_flags: <defaults>
</compile_context>

<pallas_src>
import functools

import jax
import jax.numpy as jnp
from jax import lax
from jax.experimental import pallas as pl
from jax.experimental.pallas import tpu as pltpu

D_LEVELS = 4.0   # quantization levels of the Quant surrogate
LANES = 128


def _dw1x1_kernel(x_ref, scale_ref, bias_ref, o_ref, *, t_steps, ch, num_chunks):
    """Block refs: x_ref/o_ref (T, TR, LW); scale_ref/bias_ref (TR, LW).

    Walks the TR rows in `ch`-row chunks so v / scale / bias stay in vregs across the T loop.
    """

    @pl.loop(0, num_chunks)
    def _chunk(i):
        rows = pl.ds(pl.multiple_of(i * ch, ch), ch)
        sc = scale_ref[rows, :]                     # folded conv-weight * BN scale
        bi = bias_ref[rows, :]                      # folded BN bias
        v = jnp.zeros_like(sc)                      # membrane potential (vreg-resident)
        for t in range(t_steps):                    # T is small & static -> unrolled
            v = v + x_ref[t, rows, :]               # integrate
            s = jnp.clip(jnp.round(v), 0.0, D_LEVELS)   # integer spike in [0, D_LEVELS]
            v = v - s                               # soft reset
            o_ref[t, rows, :] = s * sc + bi         # 1x1 depthwise conv + BN (pre-folded)


def _pick_lane_width(s_pad):
    for cand in (1024, 512, 256):
        if s_pad % cand == 0:
            return cand
    return LANES


def _pick_row_tile(r, t_steps, lw, target_bytes):
    """Largest row tile <= target that evenly divides r and satisfies the (8,128) rule."""
    target_rows = max(1, target_bytes // (t_steps * lw * 4))
    if r <= target_rows:
        return r
    tr = (min(target_rows, r) // 8) * 8
    while tr >= 8:
        if r % tr == 0:
            return tr
        tr -= 8
    return r   # fallback: full extent is always a legal block shape


def dw1x1_forward(x, params, *, target_block_bytes=1 << 20):
    """x: (T, B, H, W, C) float32 -> (T, B, H, W, C) float32."""
    T, B, H, W, C = x.shape
    S = H * W * C
    S_pad = ((S + LANES - 1) // LANES) * LANES      # only pads when S is not a multiple of 128
    LW = _pick_lane_width(S_pad)                    # lane width (>=128, up to 1024)
    R = S_pad // LW                                 # sublane rows per (t, b) slab
    TR = _pick_row_tile(R, T, LW, target_block_bytes)
    ch = 8 if (TR >= 8 and TR % 8 == 0) else TR     # in-kernel row-chunk size (vreg-sized)

    # Fold conv weight (Conv2d(dim,dim,1,groups=dim).weight[:,0,0,0]) with BN scale; tile the
    # per-channel params along the flattened (H,W,C) axis (period C).  Tiny: S floats each.
    eff_scale = (params["w"] * params["bn_scale"]).astype(jnp.float32)   # (C,)
    eff_bias = params["bn_bias"].astype(jnp.float32)                     # (C,)
    flat_scale = jnp.tile(eff_scale, H * W)
    flat_bias = jnp.tile(eff_bias, H * W)
    if S_pad != S:
        flat_scale = jnp.pad(flat_scale, (0, S_pad - S))
        flat_bias = jnp.pad(flat_bias, (0, S_pad - S))
    row_scale = flat_scale.reshape(R, LW)
    row_bias = flat_bias.reshape(R, LW)

    # Native layout, no transposes: (T,B,H,W,C) -> (T,B,S) -> (T,B,R,LW) are contiguous
    # trailing-dim reshapes (bitcasts), so the kernel reads/writes x exactly once from HBM.
    xk = x.reshape(T, B, S)
    if S_pad != S:
        xk = jnp.pad(xk, ((0, 0), (0, 0), (0, S_pad - S)))   # copy only on the padded path
    xk = xk.reshape(T, B, R, LW)

    kernel = functools.partial(_dw1x1_kernel, t_steps=T, ch=ch, num_chunks=TR // ch)

    out = pl.pallas_call(
        kernel,
        out_shape=jax.ShapeDtypeStruct((T, B, R, LW), jnp.float32),
        grid_spec=pltpu.PrefetchScalarGridSpec(
            num_scalar_prefetch=0,
            grid=(B, R // TR),                                   # batch x row-tiles
            in_specs=[
                pl.BlockSpec((T, None, TR, LW), lambda b, r: (0, b, r, 0)),   # x tile
                pl.BlockSpec((TR, LW), lambda b, r: (r, 0)),                  # folded scale tile
                pl.BlockSpec((TR, LW), lambda b, r: (r, 0)),                  # folded bias tile
            ],
            out_specs=pl.BlockSpec((T, None, TR, LW), lambda b, r: (0, b, r, 0)),
        ),
        compiler_params=pltpu.CompilerParams(
            # Membrane recurrence runs only over the in-block T axis, so every block is
            # independent: both grid axes are safely "parallel" (v7x megacore sharding).
            dimension_semantics=("parallel", "parallel")),
    )(xk, row_scale, row_bias)

    out = out.reshape(T, B, S_pad)
    if S_pad != S:
        out = out[:, :, :S]
    return out.reshape(T, B, H, W, C)


def init_params(key, dim):
    """Deterministic synthetic parameters (eval-mode BN).

    Correspondence with the PyTorch module:
      w[c]     == dwconv1[0].weight[c, 0, 0, 0]          (1x1 depthwise conv, groups=dim)
      bn_scale == gamma / sqrt(running_var + eps)
      bn_bias  == beta - running_mean * bn_scale
    """
    ks = jax.random.split(key, 5)
    eps = 1e-5
    w = jax.random.normal(ks[0], (dim,), jnp.float32)
    gamma = 1.0 + 0.1 * jax.random.normal(ks[1], (dim,), jnp.float32)
    beta = 0.1 * jax.random.normal(ks[2], (dim,), jnp.float32)
    mean = 0.1 * jax.random.normal(ks[3], (dim,), jnp.float32)
    var = 1.0 + 0.1 * jnp.abs(jax.random.normal(ks[4], (dim,), jnp.float32))
    bn_scale = gamma / jnp.sqrt(var + eps)
    bn_bias = beta - mean * bn_scale
    return dict(w=w, bn_scale=bn_scale, bn_bias=bn_bias)


def reference_forward(x, params):
    """Pure-JAX reference using lax.conv_general_dilated (grouped 1x1 conv) + separate BN."""
    T, B, H, W, C = x.shape
    wk = params["w"].reshape(1, 1, 1, C)          # HWIO depthwise kernel, groups=C
    dn = ("NHWC", "HWIO", "NHWC")
    v = jnp.zeros((B, H, W, C), jnp.float32)
    outs = []
    for t in range(T):
        v = v + x[t]
        s = jnp.clip(jnp.round(v), 0.0, D_LEVELS)
        v = v - s
        y = lax.conv_general_dilated(s, wk, (1, 1), "VALID",
                                     dimension_numbers=dn, feature_group_count=C,
                                     precision=lax.Precision.HIGHEST)
        y = y * params["bn_scale"] + params["bn_bias"]
        outs.append(y)
    return jnp.stack(outs, axis=0)


if __name__ == "__main__":
    fwd = jax.jit(dw1x1_forward, static_argnames=("target_block_bytes",))

    def check(T, B, H, W, C, key, **kw):
        kx, kp = jax.random.split(key)
        x = 2.0 * jax.random.normal(kx, (T, B, H, W, C), dtype=jnp.float32)
        params = init_params(kp, C)
        out = jax.block_until_ready(fwd(x, params, **kw))
        assert out.shape == (T, B, H, W, C) and out.dtype == jnp.float32
        ref = reference_forward(x, params)
        max_err = float(jnp.max(jnp.abs(out - ref)))
        assert max_err < 1e-3, f"mismatch vs reference: max abs err = {max_err}"

    k1, k2, k3 = jax.random.split(jax.random.PRNGKey(0), 3)
    check(4, 2, 16, 16, 32, k1)                                # lane-dense, one row tile / sample
    check(4, 2, 16, 16, 128, k2, target_block_bytes=1 << 18)   # multi row-tile grid + chunk loop
    check(4, 2, 7, 7, 4, k3)                                   # H*W*C not a multiple of 128 (padded)
    print("KERNEL_OK")
</pallas_src>

<mosaic_0001>
module attributes {stable_mosaic.version = 11 : i64} {
  func.func @_dw1x1_kernel(%arg0: i32, %arg1: i32, %arg2: memref<4x1x8x1024xf32, #tpu.memory_space<vmem>>, %arg3: memref<8x1024xf32, #tpu.memory_space<vmem>>, %arg4: memref<8x1024xf32, #tpu.memory_space<vmem>>, %arg5: memref<4x1x8x1024xf32, #tpu.memory_space<vmem>>) attributes {dimension_semantics = [#tpu.dimension_semantics<parallel>, #tpu.dimension_semantics<parallel>], iteration_bounds = array<i64: 2, 1>, scalar_prefetch = 0 : i64, scratch_operands = 0 : i64, tpu.core_type = #tpu.core_type<tc>, window_params = [{transform_indices = @transform_0, window_bounds = array<i64: 4, 1, 8, 1024>}, {transform_indices = @transform_1, window_bounds = array<i64: 8, 1024>}, {transform_indices = @transform_2, window_bounds = array<i64: 8, 1024>}, {transform_indices = @transform_3, window_bounds = array<i64: 4, 1, 8, 1024>}]} {
    %c0_i32 = arith.constant 0 : i32
    %c1_i32 = arith.constant 1 : i32
    %0 = arith.muli %c0_i32, %c1_i32 : i32
    %c0_i32_0 = arith.constant 0 : i32
    %1 = arith.addi %c0_i32_0, %0 : i32
    %c8_i32 = arith.constant 8 : i32
    %2 = arith.muli %1, %c8_i32 : i32
    %3 = tpu.assume_multiple %2, 8 : i32
    %4 = arith.index_cast %3 : i32 to index
    %c0 = arith.constant 0 : index
    %5 = vector.load %arg3[%4, %c0] : memref<8x1024xf32, #tpu.memory_space<vmem>>, vector<8x1024xf32>
    %6 = arith.index_cast %3 : i32 to index
    %c0_1 = arith.constant 0 : index
    %7 = vector.load %arg4[%6, %c0_1] : memref<8x1024xf32, #tpu.memory_space<vmem>>, vector<8x1024xf32>
    %cst = arith.constant 0.000000e+00 : f32
    %8 = vector.broadcast %cst : f32 to vector<8x1024xf32>
    %c0_2 = arith.constant 0 : index
    %c0_3 = arith.constant 0 : index
    %9 = arith.index_cast %3 : i32 to index
    %c0_4 = arith.constant 0 : index
    %10 = vector.load %arg2[%c0_2, %c0_3, %9, %c0_4] : memref<4x1x8x1024xf32, #tpu.memory_space<vmem>>, vector<1x1x8x1024xf32>
    %11 = vector.shape_cast %10 : vector<1x1x8x1024xf32> to vector<8x1024xf32>
    %12 = arith.addf %8, %11 : vector<8x1024xf32>
    %13 = math.roundeven %12 : vector<8x1024xf32>
    %cst_5 = arith.constant 0.000000e+00 : f32
    %cst_6 = arith.constant 4.000000e+00 : f32
    %14 = vector.broadcast %cst_5 : f32 to vector<8x1024xf32>
    %15 = arith.maximumf %14, %13 : vector<8x1024xf32>
    %16 = vector.broadcast %cst_6 : f32 to vector<8x1024xf32>
    %17 = arith.minimumf %16, %15 : vector<8x1024xf32>
    %18 = arith.subf %12, %17 : vector<8x1024xf32>
    %19 = arith.mulf %17, %5 : vector<8x1024xf32>
    %20 = arith.addf %19, %7 : vector<8x1024xf32>
    %c0_7 = arith.constant 0 : index
    %c0_8 = arith.constant 0 : index
    %21 = arith.index_cast %3 : i32 to index
    %c0_9 = arith.constant 0 : index
    %22 = vector.load %arg5[%c0_7, %c0_8, %21, %c0_9] : memref<4x1x8x1024xf32, #tpu.memory_space<vmem>>, vector<1x1x8x1024xf32>
    %23 = vector.shape_cast %22 : vector<1x1x8x1024xf32> to vector<8x1024xf32>
    %24 = vector.shape_cast %20 : vector<8x1024xf32> to vector<1x1x8x1024xf32>
    tpu.vector_store %arg5[%c0_7, %c0_8, %21, %c0_9], %24 {strides = array<i32>} : memref<4x1x8x1024xf32, #tpu.memory_space<vmem>>, vector<1x1x8x1024xf32>,
    %c1 = arith.constant 1 : index
    %c0_10 = arith.constant 0 : index
    %25 = arith.index_cast %3 : i32 to index
    %c0_11 = arith.constant 0 : index
    %26 = vector.load %arg2[%c1, %c0_10, %25, %c0_11] : memref<4x1x8x1024xf32, #tpu.memory_space<vmem>>, vector<1x1x8x1024xf32>
    %27 = vector.shape_cast %26 : vector<1x1x8x1024xf32> to vector<8x1024xf32>
    %28 = arith.addf %18, %27 : vector<8x1024xf32>
    %29 = math.roundeven %28 : vector<8x1024xf32>
    %cst_12 = arith.constant 0.000000e+00 : f32
    %cst_13 = arith.constant 4.000000e+00 : f32
    %30 = vector.broadcast %cst_12 : f32 to vector<8x1024xf32>
    %31 = arith.maximumf %30, %29 : vector<8x1024xf32>
    %32 = vector.broadcast %cst_13 : f32 to vector<8x1024xf32>
    %33 = arith.minimumf %32, %31 : vector<8x1024xf32>
    %34 = arith.subf %28, %33 : vector<8x1024xf32>
    %35 = arith.mulf %33, %5 : vector<8x1024xf32>
    %36 = arith.addf %35, %7 : vector<8x1024xf32>
    %c1_14 = arith.constant 1 : index
    %c0_15 = arith.constant 0 : index
    %37 = arith.index_cast %3 : i32 to index
    %c0_16 = arith.constant 0 : index
    %38 = vector.load %arg5[%c1_14, %c0_15, %37, %c0_16] : memref<4x1x8x1024xf32, #tpu.memory_space<vmem>>, vector<1x1x8x1024xf32>
    %39 = vector.shape_cast %38 : vector<1x1x8x1024xf32> to vector<8x1024xf32>
    %40 = vector.shape_cast %36 : vector<8x1024xf32> to vector<1x1x8x1024xf32>
    tpu.vector_store %arg5[%c1_14, %c0_15, %37, %c0_16], %40 {strides = array<i32>} : memref<4x1x8x1024xf32, #tpu.memory_space<vmem>>, vector<1x1x8x1024xf32>,
    %c2 = arith.constant 2 : index
    %c0_17 = arith.constant 0 : index
    %41 = arith.index_cast %3 : i32 to index
    %c0_18 = arith.constant 0 : index
    %42 = vector.load %arg2[%c2, %c0_17, %41, %c0_18] : memref<4x1x8x1024xf32, #tpu.memory_space<vmem>>, vector<1x1x8x1024xf32>
    %43 = vector.shape_cast %42 : vector<1x1x8x1024xf32> to vector<8x1024xf32>
    %44 = arith.addf %34, %43 : vector<8x1024xf32>
    %45 = math.roundeven %44 : vector<8x1024xf32>
    %cst_19 = arith.constant 0.000000e+00 : f32
    %cst_20 = arith.constant 4.000000e+00 : f32
    %46 = vector.broadcast %cst_19 : f32 to vector<8x1024xf32>
    %47 = arith.maximumf %46, %45 : vector<8x1024xf32>
    %48 = vector.broadcast %cst_20 : f32 to vector<8x1024xf32>
    %49 = arith.minimumf %48, %47 : vector<8x1024xf32>
    %50 = arith.subf %44, %49 : vector<8x1024xf32>
    %51 = arith.mulf %49, %5 : vector<8x1024xf32>
    %52 = arith.addf %51, %7 : vector<8x1024xf32>
    %c2_21 = arith.constant 2 : index
    %c0_22 = arith.constant 0 : index
    %53 = arith.index_cast %3 : i32 to index
    %c0_23 = arith.constant 0 : index
    %54 = vector.load %arg5[%c2_21, %c0_22, %53, %c0_23] : memref<4x1x8x1024xf32, #tpu.memory_space<vmem>>, vector<1x1x8x1024xf32>
    %55 = vector.shape_cast %54 : vector<1x1x8x1024xf32> to vector<8x1024xf32>
    %56 = vector.shape_cast %52 : vector<8x1024xf32> to vector<1x1x8x1024xf32>
    tpu.vector_store %arg5[%c2_21, %c0_22, %53, %c0_23], %56 {strides = array<i32>} : memref<4x1x8x1024xf32, #tpu.memory_space<vmem>>, vector<1x1x8x1024xf32>,
    %c3 = arith.constant 3 : index
    %c0_24 = arith.constant 0 : index
    %57 = arith.index_cast %3 : i32 to index
    %c0_25 = arith.constant 0 : index
    %58 = vector.load %arg2[%c3, %c0_24, %57, %c0_25] : memref<4x1x8x1024xf32, #tpu.memory_space<vmem>>, vector<1x1x8x1024xf32>
    %59 = vector.shape_cast %58 : vector<1x1x8x1024xf32> to vector<8x1024xf32>
    %60 = arith.addf %50, %59 : vector<8x1024xf32>
    %61 = math.roundeven %60 : vector<8x1024xf32>
    %cst_26 = arith.constant 0.000000e+00 : f32
    %cst_27 = arith.constant 4.000000e+00 : f32
    %62 = vector.broadcast %cst_26 : f32 to vector<8x1024xf32>
    %63 = arith.maximumf %62, %61 : vector<8x1024xf32>
    %64 = vector.broadcast %cst_27 : f32 to vector<8x1024xf32>
    %65 = arith.minimumf %64, %63 : vector<8x1024xf32>
    %66 = arith.mulf %65, %5 : vector<8x1024xf32>
    %67 = arith.addf %66, %7 : vector<8x1024xf32>
    %c3_28 = arith.constant 3 : index
    %c0_29 = arith.constant 0 : index
    %68 = arith.index_cast %3 : i32 to index
    %c0_30 = arith.constant 0 : index
    %69 = vector.load %arg5[%c3_28, %c0_29, %68, %c0_30] : memref<4x1x8x1024xf32, #tpu.memory_space<vmem>>, vector<1x1x8x1024xf32>
    %70 = vector.shape_cast %69 : vector<1x1x8x1024xf32> to vector<8x1024xf32>
    %71 = vector.shape_cast %67 : vector<8x1024xf32> to vector<1x1x8x1024xf32>
    tpu.vector_store %arg5[%c3_28, %c0_29, %68, %c0_30], %71 {strides = array<i32>} : memref<4x1x8x1024xf32, #tpu.memory_space<vmem>>, vector<1x1x8x1024xf32>,
    %c1_i32_31 = arith.constant 1 : i32
    return
  }
  func.func @transform_0(%arg0: i32, %arg1: i32) -> (i32, i32, i32, i32) {
    %c0_i32 = arith.constant 0 : i32
    %c0_i32_0 = arith.constant 0 : i32
    %c0_i32_1 = arith.constant 0 : i32
    return %c0_i32, %arg0, %arg1, %c0_i32_0 : i32, i32, i32, i32
  }
  func.func @transform_1(%arg0: i32, %arg1: i32) -> (i32, i32) {
    %c0_i32 = arith.constant 0 : i32
    %c0_i32_0 = arith.constant 0 : i32
    return %arg1, %c0_i32 : i32, i32
  }
  func.func @transform_2(%arg0: i32, %arg1: i32) -> (i32, i32) {
    %c0_i32 = arith.constant 0 : i32
    %c0_i32_0 = arith.constant 0 : i32
    return %arg1, %c0_i32 : i32, i32
  }
  func.func @transform_3(%arg0: i32, %arg1: i32) -> (i32, i32, i32, i32) {
    %c0_i32 = arith.constant 0 : i32
    %c0_i32_0 = arith.constant 0 : i32
    %c0_i32_1 = arith.constant 0 : i32
    return %c0_i32, %arg0, %arg1, %c0_i32_0 : i32, i32, i32, i32
  }
}

</mosaic_0001>

<llo_original>
// kernel: mul.1
$region0: #{mul.1}
  #allocation2 [shape = 's32[1]{0}', space=sflag, size = 0x4, scoped, tag = 'scoped memory for mul.1']
  %s0 = inlined_call_operand.vmem [shape: f32[32], index: 0, kind: input, shape index: {}]
  %s1 = inlined_call_operand.hbm [shape: f32[32], index: 1, kind: input, shape index: {}]
  %s2 = inlined_call_operand.vmem [shape: f32[32], index: 2, kind: output, shape index: {}]
  $region1: #{mul.1} parent=0
    #allocation0 [shape = 'u8[512]{0}', space=vmem, size = 0x400, scoped, tag = 'operand span for operand 1']
    #allocation1 [shape = 's32[1]{0}', space=sflag, size = 0x4, scoped, tag = 'scoped memory for mul.1']
    %3 = vsyncpa [#allocation1], 0
    %5 = vsyncadd [#allocation1], 0
    %s7 = sshll.u32 %s1, 4
    %s8 = int_to_ptr.hbm [resolvable:$true] %s7
    %s9 = sshll.u32 [#allocation0], 4
    %s10 = int_to_ptr.vmem [resolvable:$true] %s9
    %12 = dma.hbm_to_vmem [thread:$0]  %s8, 16, %s10, [#allocation1]
    %14 = dma.done [#allocation1], 16
    %v15 = vld [vmem:[%s0] sm:$0x1]
    %v16 = vld [vmem:[#allocation0] sm:$0x1]
    %17 = xla_tuple %v15, %v16
    %18 = xla_tuple %17
    %v19 = vmul.f32 %v15, %v16
    %20 = xla_tuple %v19
    %21 = vst [vmem:[%s2] sm:$0x1] %v19
    %22 = vsyncpa [#allocation1], 1

// kernel: dw1x1_forward.1
$region0: #{dw1x1_forward.1}
  #allocation0 [shape = 'u32[]', space=smem, size = 0x4, offset = 0x4, fixed_abs, tag = 'smem constant byte address 0x4 - core index']
  #allocation1 [shape = 'u32[72,128]{1,0:T(1,128)}', space=vmem, size = 0x9000, scoped, tag = 'internal scratch']
  %s0 = inlined_call_operand.vmem [shape: f32[4,2,8,1024], index: 0, kind: input, shape index: {}]
  %s1 = inlined_call_operand.vmem [shape: f32[8,1024], index: 1, kind: input, shape index: {}]
  %s2 = inlined_call_operand.vmem [shape: f32[8,1024], index: 2, kind: input, shape index: {}]
  %s3 = inlined_call_operand.vmem [shape: f32[4,2,8,1024], index: 3, kind: output, shape index: {}]
  %s4 = sld [smem:[#allocation0]]
  $region87: #{dw1x1_forward.1} parent=0
    _
  %s6 = ssub.s32 1, %s4
  %s7 = scalar_select 0, %s6, %s4
  $region1: #{dw1x1_forward.1} parent=0
    #allocation2 [shape = 'u8[262144]{0}', space=vmem, size = 0x40000, scoped, tag = 'input window, operand 0']
    #allocation3 [shape = 'u8[262144]{0}', space=vmem, size = 0x40000, scoped, tag = 'output window, operand 0']
    loop: start=0, step=1, limit=4
    $region2: #{dw1x1_forward.1} parent=1 // loop_pre_header
      _
    $region3: #{dw1x1_forward.1} parent=1 // loop_header
      %s9 = sphi 0, %s13
      %p10 = scmp.ge.s32.totalorder %s9, 4
      %s16 = sphi 0, %s28
      %s17 = sphi 0, %s24
      %s18 = sphi 0, %s16
      %s19 = sphi 0, %s17
      %s20 = sphi 0, %s18
      %s21 = sphi 0, %s19
      %s33 = sphi 0, %s35
      %s36 = sphi 0, %s33
      %s37 = sphi 0, %s36
      %s53 = sphi 0, %s37
      %s59 = sphi 0, %s61
      %s62 = sphi 0, %s59
      %s63 = sphi 0, %s62
      %s79 = sphi 0, %s63
      %s85 = sphi 0, %s87
      %s88 = sphi 0, %s85
      %s89 = sphi 0, %s88
      %s105 = sphi 0, %s89
      %s113 = sphi 0, %s115
      %s116 = sphi 0, %s113
      %s117 = sphi 0, %s116
      %s133 = sphi 0, %s117
    $region4: #{dw1x1_forward.1} parent=1 // loop_header_branch
      %12 = sbr.rel (%p10) target = $region8
    $region5: #{dw1x1_forward.1} parent=1 // loop_body
      %s14 = ssub.s32 %s9, 1
      %s15 = ssub.s32 %s9, 2
      %s22 = sadd.s32 1, %s17
      %p23 = scmp.ge.s32.totalorder %s22, 1
      %s24 = scalar_select %p23, 0, %s22
      %s25 = sadd.s32 1, %s16
      %s26 = scalar_select %p23, %s25, %s16
      %p27 = scmp.ge.s32.totalorder %s26, 2
      %s28 = scalar_select %p27, 0, %s26
      %s29 = ssub.s32 %s16, %s28
      %s30 = ssub.s32 %s17, %s24
      %s31 = sor.u32 %s29, %s30
      %p32 = scmp.eq.s32.totalorder %s31, 0
      %s34 = sadd.s32 %s33, 1
      %s35 = scalar_select %p32, %s33, %s34
      %p38 = pneg %p32
      %p39 = scmp.eq.s32.totalorder %s9, 1
      %p40 = por %p38, %p39
      %p41 = scmp.ne.s32.totalorder %s33, %s36
      %p42 = scmp.eq.s32.totalorder %s9, 0
      %p43 = por %p41, %p42
      %p44 = scmp.ne.s32.totalorder %s33, %s36
      %p45 = scmp.eq.s32.totalorder %s14, 1
      %p46 = por %p44, %p45
      %p47 = scmp.ne.s32.totalorder %s36, %s37
      %p48 = scmp.eq.s32.totalorder %s14, 0
      %p49 = por %p47, %p48
      %p50 = scmp.ne.s32.totalorder %s36, %s37
      %p51 = scmp.eq.s32.totalorder %s15, 1
      %p52 = por %p50, %p51
      %p54 = scmp.ne.s32.totalorder %s37, %s53
      %p55 = scmp.eq.s32.totalorder %s15, 0
      %p56 = por %p54, %p55
      %s57 = ssub.s32 %s17, %s24
      %p58 = scmp.eq.s32.totalorder %s57, 0
      %s60 = sadd.s32 %s59, 1
      %s61 = scalar_select %p58, %s59, %s60
      %p64 = pneg %p58
      %p65 = scmp.eq.s32.totalorder %s9, 1
      %p66 = por %p64, %p65
      %p67 = scmp.ne.s32.totalorder %s59, %s62
      %p68 = scmp.eq.s32.totalorder %s9, 0
      %p69 = por %p67, %p68
      %p70 = scmp.ne.s32.totalorder %s59, %s62
      %p71 = scmp.eq.s32.totalorder %s14, 1
      %p72 = por %p70, %p71
      %p73 = scmp.ne.s32.totalorder %s62, %s63
      %p74 = scmp.eq.s32.totalorder %s14, 0
      %p75 = por %p73, %p74
      %p76 = scmp.ne.s32.totalorder %s62, %s63
      %p77 = scmp.eq.s32.totalorder %s15, 1
      %p78 = por %p76, %p77
      %p80 = scmp.ne.s32.totalorder %s63, %s79
      %p81 = scmp.eq.s32.totalorder %s15, 0
      %p82 = por %p80, %p81
      %s83 = ssub.s32 %s17, %s24
      %p84 = scmp.eq.s32.totalorder %s83, 0
      %s86 = sadd.s32 %s85, 1
      %s87 = scalar_select %p84, %s85, %s86
      %p90 = pneg %p84
      %p91 = scmp.eq.s32.totalorder %s9, 1
      %p92 = por %p90, %p91
      %p93 = scmp.ne.s32.totalorder %s85, %s88
      %p94 = scmp.eq.s32.totalorder %s9, 0
      %p95 = por %p93, %p94
      %p96 = scmp.ne.s32.totalorder %s85, %s88
      %p97 = scmp.eq.s32.totalorder %s14, 1
      %p98 = por %p96, %p97
      %p99 = scmp.ne.s32.totalorder %s88, %s89
      %p100 = scmp.eq.s32.totalorder %s14, 0
      %p101 = por %p99, %p100
      %p102 = scmp.ne.s32.totalorder %s88, %s89
      %p103 = scmp.eq.s32.totalorder %s15, 1
      %p104 = por %p102, %p103
      %p106 = scmp.ne.s32.totalorder %s89, %s105
      %p107 = scmp.eq.s32.totalorder %s15, 0
      %p108 = por %p106, %p107
      %s109 = ssub.s32 %s16, %s28
      %s110 = ssub.s32 %s17, %s24
      %s111 = sor.u32 %s109, %s110
      %p112 = scmp.eq.s32.totalorder %s111, 0
      %s114 = sadd.s32 %s113, 1
      %s115 = scalar_select %p112, %s113, %s114
      %p118 = pneg %p112
      %p119 = scmp.eq.s32.totalorder %s9, 1
      %p120 = por %p118, %p119
      %p121 = scmp.ne.s32.totalorder %s113, %s116
      %p122 = scmp.eq.s32.totalorder %s9, 0
      %p123 = por %p121, %p122
      %p124 = scmp.ne.s32.totalorder %s113, %s116
      %p125 = scmp.eq.s32.totalorder %s14, 1
      %p126 = por %p124, %p125
      %p127 = scmp.ne.s32.totalorder %s116, %s117
      %p128 = scmp.eq.s32.totalorder %s14, 0
      %p129 = por %p127, %p128
      %p130 = scmp.ne.s32.totalorder %s116, %s117
      %p131 = scmp.eq.s32.totalorder %s15, 1
      %p132 = por %p130, %p131
      %p134 = scmp.ne.s32.totalorder %s117, %s133
      %p135 = scmp.eq.s32.totalorder %s15, 0
      %p136 = por %p134, %p135
      %p137 = scmp.le.s32.totalorder 1, %s9
      %p138 = scmp.lt.s32.totalorder %s9, 3
      %p139 = pnand %p137, %p138
      %p140 = pneg %p139
      // Predicated region
      $region9: #{dw1x1_forward.1} parent=5 // pred_check
        _
      $region10: #{dw1x1_forward.1} parent=5 // pred_check_branch
        %142 = sbr.rel (%p139) target = $region12
      $region11: #{dw1x1_forward.1} parent=5 // pred_region
        %s143 = ssub.s32 %s9, 1
        // Predicated region
        $region13: #{dw1x1_forward.1} parent=11 // pred_check
          %p144 = pneg %p75
        $region14: #{dw1x1_forward.1} parent=11 // pred_check_branch
          %146 = sbr.rel (%p144) target = $region16
        $region15: #{dw1x1_forward.1} parent=11 // pred_region
          %p147 = scmp.lt.s32.totalorder %s19, 0
          %s148 = scalar_select %p147, %s19, 0
          %s149 = smul.addr %s148, 8
          %s150 = smul.addr %s149, 8
          %s151 = scalar_lea.vmem %s1, %s150
        $region16: #{dw1x1_forward.1} parent=11 // pred_fallthru
          _
        // Predicated region
        $region17: #{dw1x1_forward.1} parent=11 // pred_check
          %p152 = pneg %p101
        $region18: #{dw1x1_forward.1} parent=11 // pred_check_branch
          %154 = sbr.rel (%p152) target = $region20
        $region19: #{dw1x1_forward.1} parent=11 // pred_region
          %p155 = scmp.lt.s32.totalorder %s19, 0
          %s156 = scalar_select %p155, %s19, 0
          %s157 = smul.addr %s156, 8
          %s158 = smul.addr %s157, 8
          %s159 = scalar_lea.vmem %s2, %s158
        $region20: #{dw1x1_forward.1} parent=11 // pred_fallthru
          _
      $region12: #{dw1x1_forward.1} parent=5 // pred_fallthru
        _
      %p160 = scmp.lt.s32.totalorder %s9, 2
      // Predicated region
      $region21: #{dw1x1_forward.1} parent=5 // pred_check
        %p161 = pneg %p160
      $region22: #{dw1x1_forward.1} parent=5 // pred_check_branch
        %163 = sbr.rel (%p161) target = $region24
      $region23: #{dw1x1_forward.1} parent=5 // pred_region
        // Predicated region
        $region25: #{dw1x1_forward.1} parent=23 // pred_check
          %p164 = pneg %p43
        $region26: #{dw1x1_forward.1} parent=23 // pred_check_branch
          %166 = sbr.rel (%p164) target = $region28
        $region27: #{dw1x1_forward.1} parent=23 // pred_region
          %s167 = sand.u32 %s33, 1
          %s168 = sand.u32 %s33, 1
          %s169 = smul.addr %s168, 256
          %s170 = scalar_lea.vmem [#allocation2], %s169
          %s171 = smul.addr %s17, 8
          %s172 = smul.addr %s16, 8
          %s173 = sadd.s32 %s171, %s172
          %s174 = smul.addr %s173, 8
          %s175 = scalar_lea.vmem %s0, %s174
          // Predicated region
          $region29: #{dw1x1_forward.1} parent=27 // pred_check
            _
          $region30: #{dw1x1_forward.1} parent=27 // pred_check_branch
            %177 = sbr.rel (0) target = $region32
          $region31: #{dw1x1_forward.1} parent=27 // pred_region
            // Predicated region
            $region33: #{dw1x1_forward.1} parent=31 // pred_check
              _
            $region34: #{dw1x1_forward.1} parent=31 // pred_check_branch
              %179 = sbr.rel (0) target = $region36
            $region35: #{dw1x1_forward.1} parent=31 // pred_region
              loop: start=0, step=1, limit=1
              $region37: #{dw1x1_forward.1} parent=35 // loop_pre_header
                _
              $region38: #{dw1x1_forward.1} parent=35 // loop_header
                %s181 = sphi 0, %s185
                %p182 = scmp.ge.s32.totalorder %s181, 1
                %s186 = sphi %s175, %s175
                %s187 = sphi %s170, %s170
              $region39: #{dw1x1_forward.1} parent=35 // loop_header_branch
                %184 = sbr.rel (%p182) target = $region43
              $region40: #{dw1x1_forward.1} parent=35 // loop_body
                %v188 = vld [vmem:[%s186] sm:$0xff]
                %189 = vst [vmem:[%s187] sm:$0xff] %v188
                %v190 = vld [vmem:[%s186 + $0x8] sm:$0xff]
                %191 = vst [vmem:[%s187 + $0x8] sm:$0xff] %v190
                %v192 = vld [vmem:[%s186 + $0x10] sm:$0xff]
                %193 = vst [vmem:[%s187 + $0x10] sm:$0xff] %v192
                %v194 = vld [vmem:[%s186 + $0x18] sm:$0xff]
                %195 = vst [vmem:[%s187 + $0x18] sm:$0xff] %v194
                %v196 = vld [vmem:[%s186 + $0x20] sm:$0xff]
                %197 = vst [vmem:[%s187 + $0x20] sm:$0xff] %v196
                %v198 = vld [vmem:[%s186 + $0x28] sm:$0xff]
                %199 = vst [vmem:[%s187 + $0x28] sm:$0xff] %v198
                %v200 = vld [vmem:[%s186 + $0x30] sm:$0xff]
                %201 = vst [vmem:[%s187 + $0x30] sm:$0xff] %v200
                %v202 = vld [vmem:[%s186 + $0x38] sm:$0xff]
                %203 = vst [vmem:[%s187 + $0x38] sm:$0xff] %v202
                %v204 = vld [vmem:[%s186 + $0x80] sm:$0xff]
                %205 = vst [vmem:[%s187 + $0x40] sm:$0xff] %v204
                %v206 = vld [vmem:[%s186 + $0x88] sm:$0xff]
                %207 = vst [vmem:[%s187 + $0x48] sm:$0xff] %v206
                %v208 = vld [vmem:[%s186 + $0x90] sm:$0xff]
                %209 = vst [vmem:[%s187 + $0x50] sm:$0xff] %v208
                %v210 = vld [vmem:[%s186 + $0x98] sm:$0xff]
                %211 = vst [vmem:[%s187 + $0x58] sm:$0xff] %v210
                %v212 = vld [vmem:[%s186 + $0xa0] sm:$0xff]
                %213 = vst [vmem:[%s187 + $0x60] sm:$0xff] %v212
                %v214 = vld [vmem:[%s186 + $0xa8] sm:$0xff]
                %215 = vst [vmem:[%s187 + $0x68] sm:$0xff] %v214
                %v216 = vld [vmem:[%s186 + $0xb0] sm:$0xff]
                %217 = vst [vmem:[%s187 + $0x70] sm:$0xff] %v216
                %v218 = vld [vmem:[%s186 + $0xb8] sm:$0xff]
                %219 = vst [vmem:[%s187 + $0x78] sm:$0xff] %v218
                %v220 = vld [vmem:[%s186 + $0x100] sm:$0xff]
                %221 = vst [vmem:[%s187 + $0x80] sm:$0xff] %v220
                %v222 = vld [vmem:[%s186 + $0x108] sm:$0xff]
                %223 = vst [vmem:[%s187 + $0x88] sm:$0xff] %v222
                %v224 = vld [vmem:[%s186 + $0x110] sm:$0xff]
                %225 = vst [vmem:[%s187 + $0x90] sm:$0xff] %v224
                %v226 = vld [vmem:[%s186 + $0x118] sm:$0xff]
                %227 = vst [vmem:[%s187 + $0x98] sm:$0xff] %v226
                %v228 = vld [vmem:[%s186 + $0x120] sm:$0xff]
                %229 = vst [vmem:[%s187 + $0xa0] sm:$0xff] %v228
                %v230 = vld [vmem:[%s186 + $0x128] sm:$0xff]
                %231 = vst [vmem:[%s187 + $0xa8] sm:$0xff] %v230
                %v232 = vld [vmem:[%s186 + $0x130] sm:$0xff]
                %233 = vst [vmem:[%s187 + $0xb0] sm:$0xff] %v232
                %v234 = vld [vmem:[%s186 + $0x138] sm:$0xff]
                %235 = vst [vmem:[%s187 + $0xb8] sm:$0xff] %v234
                %v236 = vld [vmem:[%s186 + $0x180] sm:$0xff]
                %237 = vst [vmem:[%s187 + $0xc0] sm:$0xff] %v236
                %v238 = vld [vmem:[%s186 + $0x188] sm:$0xff]
                %239 = vst [vmem:[%s187 + $0xc8] sm:$0xff] %v238
                %v240 = vld [vmem:[%s186 + $0x190] sm:$0xff]
                %241 = vst [vmem:[%s187 + $0xd0] sm:$0xff] %v240
                %v242 = vld [vmem:[%s186 + $0x198] sm:$0xff]
                %243 = vst [vmem:[%s187 + $0xd8] sm:$0xff] %v242
                %v244 = vld [vmem:[%s186 + $0x1a0] sm:$0xff]
                %245 = vst [vmem:[%s187 + $0xe0] sm:$0xff] %v244
                %v246 = vld [vmem:[%s186 + $0x1a8] sm:$0xff]
                %247 = vst [vmem:[%s187 + $0xe8] sm:$0xff] %v246
                %v248 = vld [vmem:[%s186 + $0x1b0] sm:$0xff]
                %249 = vst [vmem:[%s187 + $0xf0] sm:$0xff] %v248
                %v250 = vld [vmem:[%s186 + $0x1b8] sm:$0xff]
                %251 = vst [vmem:[%s187 + $0xf8] sm:$0xff] %v250
              $region41: #{dw1x1_forward.1} parent=35 // loop_footer
                %s185 = sadd.s32 1, %s181
              $region42: #{dw1x1_forward.1} parent=35 // loop_footer_branch
                %180 = sbr.rel target = $region38
              $region43: #{dw1x1_forward.1} parent=35 // loop_exit
                _
            $region36: #{dw1x1_forward.1} parent=31 // pred_fallthru
              _
            // Predicated region
            $region44: #{dw1x1_forward.1} parent=31 // pred_check
              _
            $region45: #{dw1x1_forward.1} parent=31 // pred_check_branch
              %253 = sbr.rel target = $region47
            $region46: #{dw1x1_forward.1} parent=31 // pred_region
              _
            $region47: #{dw1x1_forward.1} parent=31 // pred_fallthru
              _
          $region32: #{dw1x1_forward.1} parent=27 // pred_fallthru
            _
          %254 = vnop
        $region28: #{dw1x1_forward.1} parent=23 // pred_fallthru
          _
      $region24: #{dw1x1_forward.1} parent=5 // pred_fallthru
        _
      %p255 = scmp.le.s32.totalorder 1, %s9
      %p256 = scmp.lt.s32.totalorder %s9, 3
      %p257 = pnand %p255, %p256
      %p258 = pneg %p257
      // Predicated region
      $region48: #{dw1x1_forward.1} parent=5 // pred_check
        _
      $region49: #{dw1x1_forward.1} parent=5 // pred_check_branch
        %260 = sbr.rel (%p257) target = $region51
      $region50: #{dw1x1_forward.1} parent=5 // pred_region
        %s261 = ssub.s32 %s9, 1
        %s262 = sand.u32 %s36, 1
        %s263 = sand.u32 %s36, 1
        %s264 = smul.addr %s263, 256
        %s265 = scalar_lea.vmem [#allocation2], %s264
        // Predicated region
        $region52: #{dw1x1_forward.1} parent=50 // pred_check
          %p266 = pneg %p49
        $region53: #{dw1x1_forward.1} parent=50 // pred_check_branch
          %268 = sbr.rel (%p266) target = $region55
        $region54: #{dw1x1_forward.1} parent=50 // pred_region
          _
        $region55: #{dw1x1_forward.1} parent=50 // pred_fallthru
          _
        %s269 = sand.u32 %s36, 1
        %s270 = sand.u32 %s36, 1
        %s271 = smul.addr %s270, 256
        %s272 = scalar_lea.vmem [#allocation2], %s271
        %p273 = pneg %p49
        %p274 = pneg %p46
        %p275 = scmp.lt.s32.totalorder %s19, 0
        %s276 = scalar_select %p275, %s19, 0
        %s277 = smul.addr %s276, 8
        %s278 = smul.addr %s277, 8
        %s279 = scalar_lea.vmem %s1, %s278
        %p280 = pneg %p75
        %p281 = pneg %p72
        %p282 = scmp.lt.s32.totalorder %s19, 0
        %s283 = scalar_select %p282, %s19, 0
        %s284 = smul.addr %s283, 8
        %s285 = smul.addr %s284, 8
        %s286 = scalar_lea.vmem %s2, %s285
        %p287 = pneg %p101
        %p288 = pneg %p98
        %p289 = pneg %p129
        %p290 = pneg %p126
        %s291 = sand.u32 %s116, 1
        %s292 = sand.u32 %s116, 1
        %s293 = smul.addr %s292, 256
        %s294 = scalar_lea.vmem [#allocation3], %s293
        %p295 = scmp.lt.s32.totalorder %s19, 0
        %s296 = scalar_select %p295, %s19, 0
        %s297 = smul.addr %s296, 8
        %s298 = smul.addr %s297, 8
        %s299 = scalar_lea.vmem %s1, %s298
        %p300 = scmp.lt.s32.totalorder %s19, 0
        %s301 = scalar_select %p300, %s19, 0
        %s302 = smul.addr %s301, 8
        %s303 = smul.addr %s302, 8
        %s304 = scalar_lea.vmem %s2, %s303
        %s305 = smul.u32 0, 8
        %s306 = smul.addr %s305, 8
        %s307 = scalar_lea.vmem %s299, %s306
        %v308 = vld [vmem:[%s307] sm:$0xff]
        %v309 = vld [vmem:[%s307 + $0x8] sm:$0xff]
        %v310 = vld [vmem:[%s307 + $0x10] sm:$0xff]
        %v311 = vld [vmem:[%s307 + $0x18] sm:$0xff]
        %v312 = vld [vmem:[%s307 + $0x20] sm:$0xff]
        %v313 = vld [vmem:[%s307 + $0x28] sm:$0xff]
        %v314 = vld [vmem:[%s307 + $0x30] sm:$0xff]
        %v315 = vld [vmem:[%s307 + $0x38] sm:$0xff]
        %s316 = smul.addr %s305, 8
        %s317 = scalar_lea.vmem %s304, %s316
        %v318 = vld [vmem:[%s317] sm:$0xff]
        %v319 = vld [vmem:[%s317 + $0x8] sm:$0xff]
        %v320 = vld [vmem:[%s317 + $0x10] sm:$0xff]
        %v321 = vld [vmem:[%s317 + $0x18] sm:$0xff]
        %v322 = vld [vmem:[%s317 + $0x20] sm:$0xff]
        %v323 = vld [vmem:[%s317 + $0x28] sm:$0xff]
        %v324 = vld [vmem:[%s317 + $0x30] sm:$0xff]
        %v325 = vld [vmem:[%s317 + $0x38] sm:$0xff]
        %s326 = smul.addr %s305, 8
        %s327 = scalar_lea.vmem %s265, %s326 [#allocation2]
        %v328 = vld [vmem:[%s327] sm:$0xff]
        %v329 = vld [vmem:[%s327 + $0x8] sm:$0xff]
        %v330 = vld [vmem:[%s327 + $0x10] sm:$0xff]
        %v331 = vld [vmem:[%s327 + $0x18] sm:$0xff]
        %v332 = vld [vmem:[%s327 + $0x20] sm:$0xff]
        %v333 = vld [vmem:[%s327 + $0x28] sm:$0xff]
        %v334 = vld [vmem:[%s327 + $0x30] sm:$0xff]
        %v335 = vld [vmem:[%s327 + $0x38] sm:$0xff]
        %v336 = vadd.f32 %v328, 0.0
        %v337 = vadd.f32 %v329, 0.0
        %v338 = vadd.f32 %v330, 0.0
        %v339 = vadd.f32 %v331, 0.0
        %v340 = vadd.f32 %v332, 0.0
        %v341 = vadd.f32 %v333, 0.0
        %v342 = vadd.f32 %v334, 0.0
        %v343 = vadd.f32 %v335, 0.0
        %v344 = vround.ne.pseudo %v336
        %v345 = vround.ne.pseudo %v337
        %v346 = vround.ne.pseudo %v338
        %v347 = vround.ne.pseudo %v339
        %v348 = vround.ne.pseudo %v340
        %v349 = vround.ne.pseudo %v341
        %v350 = vround.ne.pseudo %v342
        %v351 = vround.ne.pseudo %v343
        %v352 = vmax.f32 %v344, 0.0
        %v353 = vmax.f32 %v345, 0.0
        %v354 = vmax.f32 %v346, 0.0
        %v355 = vmax.f32 %v347, 0.0
        %v356 = vmax.f32 %v348, 0.0
        %v357 = vmax.f32 %v349, 0.0
        %v358 = vmax.f32 %v350, 0.0
        %v359 = vmax.f32 %v351, 0.0
        %v360 = vmin.f32 %v352, 4.0
        %v361 = vmin.f32 %v353, 4.0
        %v362 = vmin.f32 %v354, 4.0
        %v363 = vmin.f32 %v355, 4.0
        %v364 = vmin.f32 %v356, 4.0
        %v365 = vmin.f32 %v357, 4.0
        %v366 = vmin.f32 %v358, 4.0
        %v367 = vmin.f32 %v359, 4.0
        %v368 = vsub.f32 %v336, %v360
        %v369 = vsub.f32 %v337, %v361
        %v370 = vsub.f32 %v338, %v362
        %v371 = vsub.f32 %v339, %v363
        %v372 = vsub.f32 %v340, %v364
        %v373 = vsub.f32 %v341, %v365
        %v374 = vsub.f32 %v342, %v366
        %v375 = vsub.f32 %v343, %v367
        %v376 = vmul.f32 %v360, %v308
        %v377 = vmul.f32 %v361, %v309
        %v378 = vmul.f32 %v362, %v310
        %v379 = vmul.f32 %v363, %v311
        %v380 = vmul.f32 %v364, %v312
        %v381 = vmul.f32 %v365, %v313
        %v382 = vmul.f32 %v366, %v314
        %v383 = vmul.f32 %v367, %v315
        %v384 = vadd.f32 %v376, %v318
        %v385 = vadd.f32 %v377, %v319
        %v386 = vadd.f32 %v378, %v320
        %v387 = vadd.f32 %v379, %v321
        %v388 = vadd.f32 %v380, %v322
        %v389 = vadd.f32 %v381, %v323
        %v390 = vadd.f32 %v382, %v324
        %v391 = vadd.f32 %v383, %v325
        %s392 = smul.addr %s305, 8
        %s393 = scalar_lea.vmem %s294, %s392 [#allocation3]
        %394 = vst [vmem:[%s393] sm:$0xff] %v384
        %395 = vst [vmem:[%s393 + $0x8] sm:$0xff] %v385
        %396 = vst [vmem:[%s393 + $0x10] sm:$0xff] %v386
        %397 = vst [vmem:[%s393 + $0x18] sm:$0xff] %v387
        %398 = vst [vmem:[%s393 + $0x20] sm:$0xff] %v388
        %399 = vst [vmem:[%s393 + $0x28] sm:$0xff] %v389
        %400 = vst [vmem:[%s393 + $0x30] sm:$0xff] %v390
        %401 = vst [vmem:[%s393 + $0x38] sm:$0xff] %v391
        %s402 = sadd.s32 %s305, 8
        %s403 = smul.addr %s402, 8
        %s404 = scalar_lea.vmem %s265, %s403 [#allocation2]
        %v405 = vld [vmem:[%s404] sm:$0xff]
        %v406 = vld [vmem:[%s404 + $0x8] sm:$0xff]
        %v407 = vld [vmem:[%s404 + $0x10] sm:$0xff]
        %v408 = vld [vmem:[%s404 + $0x18] sm:$0xff]
        %v409 = vld [vmem:[%s404 + $0x20] sm:$0xff]
        %v410 = vld [vmem:[%s404 + $0x28] sm:$0xff]
        %v411 = vld [vmem:[%s404 + $0x30] sm:$0xff]
        %v412 = vld [vmem:[%s404 + $0x38] sm:$0xff]
        %v413 = vadd.f32 %v368, %v405
        %v414 = vadd.f32 %v369, %v406
        %v415 = vadd.f32 %v370, %v407
        %v416 = vadd.f32 %v371, %v408
        %v417 = vadd.f32 %v372, %v409
        %v418 = vadd.f32 %v373, %v410
        %v419 = vadd.f32 %v374, %v411
        %v420 = vadd.f32 %v375, %v412
        %v421 = vround.ne.pseudo %v413
        %v422 = vround.ne.pseudo %v414
        %v423 = vround.ne.pseudo %v415
        %v424 = vround.ne.pseudo %v416
        %v425 = vround.ne.pseudo %v417
        %v426 = vround.ne.pseudo %v418
        %v427 = vround.ne.pseudo %v419
        %v428 = vround.ne.pseudo %v420
        %v429 = vmax.f32 %v421, 0.0
        %v430 = vmax.f32 %v422, 0.0
        %v431 = vmax.f32 %v423, 0.0
        %v432 = vmax.f32 %v424, 0.0
        %v433 = vmax.f32 %v425, 0.0
        %v434 = vmax.f32 %v426, 0.0
        %v435 = vmax.f32 %v427, 0.0
        %v436 = vmax.f32 %v428, 0.0
        %v437 = vmin.f32 %v429, 4.0
        %v438 = vmin.f32 %v430, 4.0
        %v439 = vmin.f32 %v431, 4.0
        %v440 = vmin.f32 %v432, 4.0
        %v441 = vmin.f32 %v433, 4.0
        %v442 = vmin.f32 %v434, 4.0
        %v443 = vmin.f32 %v435, 4.0
        %v444 = vmin.f32 %v436, 4.0
        %v445 = vsub.f32 %v413, %v437
        %v446 = vsub.f32 %v414, %v438
        %v447 = vsub.f32 %v415, %v439
        %v448 = vsub.f32 %v416, %v440
        %v449 = vsub.f32 %v417, %v441
        %v450 = vsub.f32 %v418, %v442
        %v451 = vsub.f32 %v419, %v443
        %v452 = vsub.f32 %v420, %v444
        %v453 = vmul.f32 %v437, %v308
        %v454 = vmul.f32 %v438, %v309
        %v455 = vmul.f32 %v439, %v310
        %v456 = vmul.f32 %v440, %v311
        %v457 = vmul.f32 %v441, %v312
        %v458 = vmul.f32 %v442, %v313
        %v459 = vmul.f32 %v443, %v314
        %v460 = vmul.f32 %v444, %v315
        %v461 = vadd.f32 %v453, %v318
        %v462 = vadd.f32 %v454, %v319
        %v463 = vadd.f32 %v455, %v320
        %v464 = vadd.f32 %v456, %v321
        %v465 = vadd.f32 %v457, %v322
        %v466 = vadd.f32 %v458, %v323
        %v467 = vadd.f32 %v459, %v324
        %v468 = vadd.f32 %v460, %v325
        %s469 = smul.addr %s402, 8
        %s470 = scalar_lea.vmem %s294, %s469 [#allocation3]
        %471 = vst [vmem:[%s470] sm:$0xff] %v461
        %472 = vst [vmem:[%s470 + $0x8] sm:$0xff] %v462
        %473 = vst [vmem:[%s470 + $0x10] sm:$0xff] %v463
        %474 = vst [vmem:[%s470 + $0x18] sm:$0xff] %v464
        %475 = vst [vmem:[%s470 + $0x20] sm:$0xff] %v465
        %476 = vst [vmem:[%s470 + $0x28] sm:$0xff] %v466
        %477 = vst [vmem:[%s470 + $0x30] sm:$0xff] %v467
        %478 = vst [vmem:[%s470 + $0x38] sm:$0xff] %v468
        %s479 = sadd.s32 %s305, 16
        %s480 = smul.addr %s479, 8
        %s481 = scalar_lea.vmem %s265, %s480 [#allocation2]
        %v482 = vld [vmem:[%s481] sm:$0xff]
        %v483 = vld [vmem:[%s481 + $0x8] sm:$0xff]
        %v484 = vld [vmem:[%s481 + $0x10] sm:$0xff]
        %v485 = vld [vmem:[%s481 + $0x18] sm:$0xff]
        %v486 = vld [vmem:[%s481 + $0x20] sm:$0xff]
        %v487 = vld [vmem:[%s481 + $0x28] sm:$0xff]
        %v488 = vld [vmem:[%s481 + $0x30] sm:$0xff]
        %v489 = vld [vmem:[%s481 + $0x38] sm:$0xff]
        %v490 = vadd.f32 %v445, %v482
        %v491 = vadd.f32 %v446, %v483
        %v492 = vadd.f32 %v447, %v484
        %v493 = vadd.f32 %v448, %v485
        %v494 = vadd.f32 %v449, %v486
        %v495 = vadd.f32 %v450, %v487
        %v496 = vadd.f32 %v451, %v488
        %v497 = vadd.f32 %v452, %v489
        %v498 = vround.ne.pseudo %v490
        %v499 = vround.ne.pseudo %v491
        %v500 = vround.ne.pseudo %v492
        %v501 = vround.ne.pseudo %v493
        %v502 = vround.ne.pseudo %v494
        %v503 = vround.ne.pseudo %v495
        %v504 = vround.ne.pseudo %v496
        %v505 = vround.ne.pseudo %v497
        %v506 = vmax.f32 %v498, 0.0
        %v507 = vmax.f32 %v499, 0.0
        %v508 = vmax.f32 %v500, 0.0
        %v509 = vmax.f32 %v501, 0.0
        %v510 = vmax.f32 %v502, 0.0
        %v511 = vmax.f32 %v503, 0.0
        %v512 = vmax.f32 %v504, 0.0
        %v513 = vmax.f32 %v505, 0.0
        %v514 = vmin.f32 %v506, 4.0
        %v515 = vmin.f32 %v507, 4.0
        %v516 = vmin.f32 %v508, 4.0
        %v517 = vmin.f32 %v509, 4.0
        %v518 = vmin.f32 %v510, 4.0
        %v519 = vmin.f32 %v511, 4.0
        %v520 = vmin.f32 %v512, 4.0
        %v521 = vmin.f32 %v513, 4.0
        %v522 = vsub.f32 %v490, %v514
        %v523 = vsub.f32 %v491, %v515
        %v524 = vsub.f32 %v492, %v516
        %v525 = vsub.f32 %v493, %v517
        %v526 = vsub.f32 %v494, %v518
        %v527 = vsub.f32 %v495, %v519
        %v528 = vsub.f32 %v496, %v520
        %v529 = vsub.f32 %v497, %v521
        %v530 = vmul.f32 %v514, %v308
        %v531 = vmul.f32 %v515, %v309
        %v532 = vmul.f32 %v516, %v310
        %v533 = vmul.f32 %v517, %v311
        %v534 = vmul.f32 %v518, %v312
        %v535 = vmul.f32 %v519, %v313
        %v536 = vmul.f32 %v520, %v314
        %v537 = vmul.f32 %v521, %v315
        %v538 = vadd.f32 %v530, %v318
        %v539 = vadd.f32 %v531, %v319
        %v540 = vadd.f32 %v532, %v320
        %v541 = vadd.f32 %v533, %v321
        %v542 = vadd.f32 %v534, %v322
        %v543 = vadd.f32 %v535, %v323
        %v544 = vadd.f32 %v536, %v324
        %v545 = vadd.f32 %v537, %v325
        %s546 = smul.addr %s479, 8
        %s547 = scalar_lea.vmem %s294, %s546 [#allocation3]
        %548 = vst [vmem:[%s547] sm:$0xff] %v538
        %549 = vst [vmem:[%s547 + $0x8] sm:$0xff] %v539
        %550 = vst [vmem:[%s547 + $0x10] sm:$0xff] %v540
        %551 = vst [vmem:[%s547 + $0x18] sm:$0xff] %v541
        %552 = vst [vmem:[%s547 + $0x20] sm:$0xff] %v542
        %553 = vst [vmem:[%s547 + $0x28] sm:$0xff] %v543
        %554 = vst [vmem:[%s547 + $0x30] sm:$0xff] %v544
        %555 = vst [vmem:[%s547 + $0x38] sm:$0xff] %v545
        %s556 = sadd.s32 %s305, 24
        %s557 = smul.addr %s556, 8
        %s558 = scalar_lea.vmem %s265, %s557 [#allocation2]
        %v559 = vld [vmem:[%s558] sm:$0xff]
        %v560 = vld [vmem:[%s558 + $0x8] sm:$0xff]
        %v561 = vld [vmem:[%s558 + $0x10] sm:$0xff]
        %v562 = vld [vmem:[%s558 + $0x18] sm:$0xff]
        %v563 = vld [vmem:[%s558 + $0x20] sm:$0xff]
        %v564 = vld [vmem:[%s558 + $0x28] sm:$0xff]
        %v565 = vld [vmem:[%s558 + $0x30] sm:$0xff]
        %v566 = vld [vmem:[%s558 + $0x38] sm:$0xff]
        %v567 = vadd.f32 %v522, %v559
        %v568 = vadd.f32 %v523, %v560
        %v569 = vadd.f32 %v524, %v561
        %v570 = vadd.f32 %v525, %v562
        %v571 = vadd.f32 %v526, %v563
        %v572 = vadd.f32 %v527, %v564
        %v573 = vadd.f32 %v528, %v565
        %v574 = vadd.f32 %v529, %v566
        %v575 = vround.ne.pseudo %v567
        %v576 = vround.ne.pseudo %v568
        %v577 = vround.ne.pseudo %v569
        %v578 = vround.ne.pseudo %v570
        %v579 = vround.ne.pseudo %v571
        %v580 = vround.ne.pseudo %v572
        %v581 = vround.ne.pseudo %v573
        %v582 = vround.ne.pseudo %v574
        %v583 = vmax.f32 %v575, 0.0
        %v584 = vmax.f32 %v576, 0.0
        %v585 = vmax.f32 %v577, 0.0
        %v586 = vmax.f32 %v578, 0.0
        %v587 = vmax.f32 %v579, 0.0
        %v588 = vmax.f32 %v580, 0.0
        %v589 = vmax.f32 %v581, 0.0
        %v590 = vmax.f32 %v582, 0.0
        %v591 = vmin.f32 %v583, 4.0
        %v592 = vmin.f32 %v584, 4.0
        %v593 = vmin.f32 %v585, 4.0
        %v594 = vmin.f32 %v586, 4.0
        %v595 = vmin.f32 %v587, 4.0
        %v596 = vmin.f32 %v588, 4.0
        %v597 = vmin.f32 %v589, 4.0
        %v598 = vmin.f32 %v590, 4.0
        %v599 = vmul.f32 %v591, %v308
        %v600 = vmul.f32 %v592, %v309
        %v601 = vmul.f32 %v593, %v310
        %v602 = vmul.f32 %v594, %v311
        %v603 = vmul.f32 %v595, %v312
        %v604 = vmul.f32 %v596, %v313
        %v605 = vmul.f32 %v597, %v314
        %v606 = vmul.f32 %v598, %v315
        %v607 = vadd.f32 %v599, %v318
        %v608 = vadd.f32 %v600, %v319
        %v609 = vadd.f32 %v601, %v320
        %v610 = vadd.f32 %v602, %v321
        %v611 = vadd.f32 %v603, %v322
        %v612 = vadd.f32 %v604, %v323
        %v613 = vadd.f32 %v605, %v324
        %v614 = vadd.f32 %v606, %v325
        %s615 = smul.addr %s556, 8
        %s616 = scalar_lea.vmem %s294, %s615 [#allocation3]
        %617 = vst [vmem:[%s616] sm:$0xff] %v607
        %618 = vst [vmem:[%s616 + $0x8] sm:$0xff] %v608
        %619 = vst [vmem:[%s616 + $0x10] sm:$0xff] %v609
        %620 = vst [vmem:[%s616 + $0x18] sm:$0xff] %v610
        %621 = vst [vmem:[%s616 + $0x20] sm:$0xff] %v611
        %622 = vst [vmem:[%s616 + $0x28] sm:$0xff] %v612
        %623 = vst [vmem:[%s616 + $0x30] sm:$0xff] %v613
        %624 = vst [vmem:[%s616 + $0x38] sm:$0xff] %v614
        %s625 = sand.u32 %s116, 1
        %s626 = sand.u32 %s116, 1
        %s627 = smul.addr %s626, 256
        %s628 = scalar_lea.vmem [#allocation3], %s627
        // Predicated region
        $region56: #{dw1x1_forward.1} parent=50 // pred_check
          %p629 = pneg %p126
        $region57: #{dw1x1_forward.1} parent=50 // pred_check_branch
          %631 = sbr.rel (%p629) target = $region59
        $region58: #{dw1x1_forward.1} parent=50 // pred_region
          %s632 = smul.addr %s19, 8
          %s633 = smul.addr %s18, 8
          %s634 = sadd.s32 %s632, %s633
          %s635 = smul.addr %s634, 8
          %s636 = scalar_lea.vmem %s3, %s635
          // Predicated region
          $region60: #{dw1x1_forward.1} parent=58 // pred_check
            _
          $region61: #{dw1x1_forward.1} parent=58 // pred_check_branch
            %638 = sbr.rel (0) target = $region63
          $region62: #{dw1x1_forward.1} parent=58 // pred_region
            // Predicated region
            $region64: #{dw1x1_forward.1} parent=62 // pred_check
              _
            $region65: #{dw1x1_forward.1} parent=62 // pred_check_branch
              %640 = sbr.rel (0) target = $region67
            $region66: #{dw1x1_forward.1} parent=62 // pred_region
              loop: start=0, step=1, limit=1
              $region68: #{dw1x1_forward.1} parent=66 // loop_pre_header
                _
              $region69: #{dw1x1_forward.1} parent=66 // loop_header
                %s642 = sphi 0, %s646
                %p643 = scmp.ge.s32.totalorder %s642, 1
                %s647 = sphi %s628, %s628
                %s648 = sphi %s636, %s636
              $region70: #{dw1x1_forward.1} parent=66 // loop_header_branch
                %645 = sbr.rel (%p643) target = $region74
              $region71: #{dw1x1_forward.1} parent=66 // loop_body
                %v649 = vld [vmem:[%s647] sm:$0xff]
                %650 = vst [vmem:[%s648] sm:$0xff] %v649
                %v651 = vld [vmem:[%s647 + $0x8] sm:$0xff]
                %652 = vst [vmem:[%s648 + $0x8] sm:$0xff] %v651
                %v653 = vld [vmem:[%s647 + $0x10] sm:$0xff]
                %654 = vst [vmem:[%s648 + $0x10] sm:$0xff] %v653
                %v655 = vld [vmem:[%s647 + $0x18] sm:$0xff]
                %656 = vst [vmem:[%s648 + $0x18] sm:$0xff] %v655
                %v657 = vld [vmem:[%s647 + $0x20] sm:$0xff]
                %658 = vst [vmem:[%s648 + $0x20] sm:$0xff] %v657
                %v659 = vld [vmem:[%s647 + $0x28] sm:$0xff]
                %660 = vst [vmem:[%s648 + $0x28] sm:$0xff] %v659
                %v661 = vld [vmem:[%s647 + $0x30] sm:$0xff]
                %662 = vst [vmem:[%s648 + $0x30] sm:$0xff] %v661
                %v663 = vld [vmem:[%s647 + $0x38] sm:$0xff]
                %664 = vst [vmem:[%s648 + $0x38] sm:$0xff] %v663
                %v665 = vld [vmem:[%s647 + $0x40] sm:$0xff]
                %666 = vst [vmem:[%s648 + $0x80] sm:$0xff] %v665
                %v667 = vld [vmem:[%s647 + $0x48] sm:$0xff]
                %668 = vst [vmem:[%s648 + $0x88] sm:$0xff] %v667
                %v669 = vld [vmem:[%s647 + $0x50] sm:$0xff]
                %670 = vst [vmem:[%s648 + $0x90] sm:$0xff] %v669
                %v671 = vld [vmem:[%s647 + $0x58] sm:$0xff]
                %672 = vst [vmem:[%s648 + $0x98] sm:$0xff] %v671
                %v673 = vld [vmem:[%s647 + $0x60] sm:$0xff]
                %674 = vst [vmem:[%s648 + $0xa0] sm:$0xff] %v673
                %v675 = vld [vmem:[%s647 + $0x68] sm:$0xff]
                %676 = vst [vmem:[%s648 + $0xa8] sm:$0xff] %v675
                %v677 = vld [vmem:[%s647 + $0x70] sm:$0xff]
                %678 = vst [vmem:[%s648 + $0xb0] sm:$0xff] %v677
                %v679 = vld [vmem:[%s647 + $0x78] sm:$0xff]
                %680 = vst [vmem:[%s648 + $0xb8] sm:$0xff] %v679
                %v681 = vld [vmem:[%s647 + $0x80] sm:$0xff]
                %682 = vst [vmem:[%s648 + $0x100] sm:$0xff] %v681
                %v683 = vld [vmem:[%s647 + $0x88] sm:$0xff]
                %684 = vst [vmem:[%s648 + $0x108] sm:$0xff] %v683
                %v685 = vld [vmem:[%s647 + $0x90] sm:$0xff]
                %686 = vst [vmem:[%s648 + $0x110] sm:$0xff] %v685
                %v687 = vld [vmem:[%s647 + $0x98] sm:$0xff]
                %688 = vst [vmem:[%s648 + $0x118] sm:$0xff] %v687
                %v689 = vld [vmem:[%s647 + $0xa0] sm:$0xff]
                %690 = vst [vmem:[%s648 + $0x120] sm:$0xff] %v689
                %v691 = vld [vmem:[%s647 + $0xa8] sm:$0xff]
                %692 = vst [vmem:[%s648 + $0x128] sm:$0xff] %v691
                %v693 = vld [vmem:[%s647 + $0xb0] sm:$0xff]
                %694 = vst [vmem:[%s648 + $0x130] sm:$0xff] %v693
                %v695 = vld [vmem:[%s647 + $0xb8] sm:$0xff]
                %696 = vst [vmem:[%s648 + $0x138] sm:$0xff] %v695
                %v697 = vld [vmem:[%s647 + $0xc0] sm:$0xff]
                %698 = vst [vmem:[%s648 + $0x180] sm:$0xff] %v697
                %v699 = vld [vmem:[%s647 + $0xc8] sm:$0xff]
                %700 = vst [vmem:[%s648 + $0x188] sm:$0xff] %v699
                %v701 = vld [vmem:[%s647 + $0xd0] sm:$0xff]
                %702 = vst [vmem:[%s648 + $0x190] sm:$0xff] %v701
                %v703 = vld [vmem:[%s647 + $0xd8] sm:$0xff]
                %704 = vst [vmem:[%s648 + $0x198] sm:$0xff] %v703
                %v705 = vld [vmem:[%s647 + $0xe0] sm:$0xff]
                %706 = vst [vmem:[%s648 + $0x1a0] sm:$0xff] %v705
                %v707 = vld [vmem:[%s647 + $0xe8] sm:$0xff]
                %708 = vst [vmem:[%s648 + $0x1a8] sm:$0xff] %v707
                %v709 = vld [vmem:[%s647 + $0xf0] sm:$0xff]
                %710 = vst [vmem:[%s648 + $0x1b0] sm:$0xff] %v709
                %v711 = vld [vmem:[%s647 + $0xf8] sm:$0xff]
                %712 = vst [vmem:[%s648 + $0x1b8] sm:$0xff] %v711
              $region72: #{dw1x1_forward.1} parent=66 // loop_footer
                %s646 = sadd.s32 1, %s642
              $region73: #{dw1x1_forward.1} parent=66 // loop_footer_branch
                %641 = sbr.rel target = $region69
              $region74: #{dw1x1_forward.1} parent=66 // loop_exit
                _
            $region67: #{dw1x1_forward.1} parent=62 // pred_fallthru
              _
            // Predicated region
            $region75: #{dw1x1_forward.1} parent=62 // pred_check
              _
            $region76: #{dw1x1_forward.1} parent=62 // pred_check_branch
              %714 = sbr.rel target = $region78
            $region77: #{dw1x1_forward.1} parent=62 // pred_region
              _
            $region78: #{dw1x1_forward.1} parent=62 // pred_fallthru
              _
          $region63: #{dw1x1_forward.1} parent=58 // pred_fallthru
            _
          %715 = vnop
        $region59: #{dw1x1_forward.1} parent=50 // pred_fallthru
          _
      $region51: #{dw1x1_forward.1} parent=5 // pred_fallthru
        _
      %p716 = scmp.le.s32.totalorder 2, %s9
      // Predicated region
      $region79: #{dw1x1_forward.1} parent=5 // pred_check
        %p717 = pneg %p716
      $region80: #{dw1x1_forward.1} parent=5 // pred_check_branch
        %719 = sbr.rel (%p717) target = $region82
      $region81: #{dw1x1_forward.1} parent=5 // pred_region
        %s720 = ssub.s32 %s9, 2
        // Predicated region
        $region83: #{dw1x1_forward.1} parent=81 // pred_check
          %p721 = pneg %p132
        $region84: #{dw1x1_forward.1} parent=81 // pred_check_branch
          %723 = sbr.rel (%p721) target = $region86
        $region85: #{dw1x1_forward.1} parent=81 // pred_region
          %s724 = sand.u32 %s117, 1
          %s725 = sand.u32 %s117, 1
          %s726 = smul.addr %s725, 256
          %s727 = scalar_lea.vmem [#allocation3], %s726
        $region86: #{dw1x1_forward.1} parent=81 // pred_fallthru
          _
      $region82: #{dw1x1_forward.1} parent=5 // pred_fallthru
        _
    $region6: #{dw1x1_forward.1} parent=1 // loop_footer
      %s13 = sadd.s32 1, %s9
    $region7: #{dw1x1_forward.1} parent=1 // loop_footer_branch
      %8 = sbr.rel target = $region3
    $region8: #{dw1x1_forward.1} parent=1 // loop_exit
      _

</llo_original>
